<compile_context>
chip_gen: v6e
topology: v6e:2x2x1
jax: 0.10.0
libtpu: 0.0.40
codegen_flags: <defaults>
</compile_context>

<pallas_src>
import functools

import jax
import jax.numpy as jnp
from jax import lax
from jax.experimental import pallas as pl
from jax.experimental.pallas import tpu as pltpu


def _vmem_budget():
    """Generation-aware VMEM budgeting (v7x: 64 MiB/TC; v5e/v6e: 128 MiB)."""
    try:
        cap = getattr(pltpu.get_tpu_info(), "vmem_capacity_bytes", 64 << 20)
    except Exception:
        cap = 64 << 20  # conservative default (v7x-class)
    if cap >= 100 << 20:  # v5e / v6e
        return {"block_bytes": 8 << 20, "vmem_limit": 64 << 20,
                "fused_bytes": 40 << 20}
    # v7x-class: pass 2 holds ~4 double-buffered blocks -> keep blocks small.
    return {"block_bytes": 4 << 20, "vmem_limit": 48 << 20,
            "fused_bytes": 20 << 20}


# -----------------------------------------------------------------------------
# Kernels
# -----------------------------------------------------------------------------
def _bn_fused_kernel(x_ref, gamma_ref, beta_ref, o_ref, *, inv_count, eps):
    """Whole-slab path: stats + normalize in one VMEM-resident pass."""
    xf = x_ref[...].astype(jnp.float32)                        # (B, N, T)
    s = jnp.sum(jnp.sum(xf, axis=2, keepdims=True), axis=0)    # (N, 1)
    sq = jnp.sum(jnp.sum(xf * xf, axis=2, keepdims=True), axis=0)
    mean = s * inv_count
    var = jnp.maximum(sq * inv_count - mean * mean, 0.0)       # clamp cancellation
    inv_std = lax.rsqrt(var + eps)                             # EUP
    scale = gamma_ref[...] * inv_std                           # (N, 1)
    shift = beta_ref[...] - mean * scale
    o_ref[...] = (xf * scale + shift).astype(o_ref.dtype)


def _bn_stats_kernel(x_ref, psum_ref, psumsq_ref):
    """Per-batch partial sum / sum-of-squares over the time axis.

    x_ref:   (1, N, TILE_T) native-dtype block
    psum/psumsq: (1, N, 1) f32, resident across the T grid axis for this batch
    """
    @pl.when(pl.program_id(1) == 0)
    def _():
        psum_ref[...] = jnp.zeros_like(psum_ref)
        psumsq_ref[...] = jnp.zeros_like(psumsq_ref)

    xt = x_ref[0].astype(jnp.float32)                          # (N, TILE_T)
    psum_ref[0] += jnp.sum(xt, axis=1, keepdims=True)          # XLU reduce
    psumsq_ref[0] += jnp.sum(xt * xt, axis=1, keepdims=True)


def _bn_norm_kernel(x_ref, scale_ref, shift_ref, o_ref):
    """Single broadcast FMA: y = x * scale + shift (scale/shift precomputed)."""
    o_ref[0] = (x_ref[0].astype(jnp.float32) * scale_ref[...]
                + shift_ref[...]).astype(o_ref.dtype)


# -----------------------------------------------------------------------------
# Wrapper
# -----------------------------------------------------------------------------
def temporal_batch_norm(x, gamma, beta, *, per_channel=True, eps=1e-5,
                        force_path=None):
    """TemporalBatchNorm.forward with training-mode batch statistics.

    x: (B, C, bands, T). gamma/beta: (num_features,), num_features = C*bands
    if per_channel else bands. force_path in {None, "fused", "tiled"} (testing).
    """
    shape = x.shape
    if per_channel:
        x3 = x.reshape(shape[0], -1, shape[-1])                # (B, C*bands, T)
    else:
        x3 = x.reshape((-1,) + shape[-2:])                     # (B*C, bands, T)
    Bn, N, T = x3.shape
    out_dtype = x.dtype

    budget = _vmem_budget()
    gamma2 = gamma.reshape(N, 1).astype(jnp.float32)
    beta2 = beta.reshape(N, 1).astype(jnp.float32)
    inv_count = 1.0 / float(Bn * T)
    eps = float(eps)

    # ---- Fused fast path: whole slab resident in VMEM (1 read + 1 write).
    use_fused = 3 * (Bn * N * T * 4) <= budget["fused_bytes"]
    if force_path == "fused":
        use_fused = True
    elif force_path == "tiled":
        use_fused = False

    if use_fused:
        out3 = pl.pallas_call(
            functools.partial(_bn_fused_kernel, inv_count=inv_count, eps=eps),
            out_shape=jax.ShapeDtypeStruct((Bn, N, T), out_dtype),
            compiler_params=pltpu.CompilerParams(
                vmem_limit_bytes=budget["vmem_limit"]),
        )(x3, gamma2, beta2)
        return out3.reshape(shape)

    # ---- Tiled two-pass path (large activations).
    itemsize = max(jnp.dtype(x3.dtype).itemsize, 4)  # budget for f32 temporaries
    bytes_per_col = N * itemsize
    max_tile_t = max(128, (budget["block_bytes"] // bytes_per_col) // 128 * 128)
    tile_t = min(max_tile_t, pl.cdiv(T, 128) * 128)
    Tp = pl.cdiv(T, tile_t) * tile_t
    if Tp != T:
        # Zero padding is exact for sum/sumsq (the real count is used below);
        # the padded output columns are sliced off at the end.
        x3 = jnp.pad(x3, ((0, 0), (0, 0), (0, Tp - T)))

    grid = (Bn, Tp // tile_t)
    x_spec = pl.BlockSpec((1, N, tile_t), lambda b, t: (b, 0, t))
    stat_in_spec = pl.BlockSpec((N, 1), lambda b, t: (0, 0))
    pstat_spec = pl.BlockSpec((1, N, 1), lambda b, t: (b, 0, 0))

    # Pass 1: per-batch partial stats (batch axis "parallel" -> v7x megacore).
    psum, psumsq = pl.pallas_call(
        _bn_stats_kernel,
        out_shape=(jax.ShapeDtypeStruct((Bn, N, 1), jnp.float32),
                   jax.ShapeDtypeStruct((Bn, N, 1), jnp.float32)),
        grid=grid,
        in_specs=[x_spec],
        out_specs=(pstat_spec, pstat_spec),
        compiler_params=pltpu.CompilerParams(
            dimension_semantics=("parallel", "arbitrary"),
            vmem_limit_bytes=budget["vmem_limit"]),
    )(x3)

    # Tiny epilogue on (N,1) arrays: fold batch partials, derive scale/shift.
    feat_sum = jnp.sum(psum, axis=0)
    feat_sumsq = jnp.sum(psumsq, axis=0)
    mean = feat_sum * inv_count
    var = jnp.maximum(feat_sumsq * inv_count - mean * mean, 0.0)
    scale = gamma2 * lax.rsqrt(var + eps)
    shift = beta2 - mean * scale

    # Pass 2: pure elementwise FMA, fully parallel grid, native-dtype output.
    out3 = pl.pallas_call(
        _bn_norm_kernel,
        out_shape=jax.ShapeDtypeStruct((Bn, N, Tp), out_dtype),
        grid=grid,
        in_specs=[x_spec, stat_in_spec, stat_in_spec],
        out_specs=x_spec,
        compiler_params=pltpu.CompilerParams(
            dimension_semantics=("parallel", "parallel"),
            vmem_limit_bytes=budget["vmem_limit"]),
    )(x3, scale, shift)

    if Tp != T:
        out3 = out3[:, :, :T]
    # TODO(synk): nn.BatchNorm1d's running_mean/running_var buffer update
    # (training-mode side effect) is not reproduced; forward output unaffected.
    return out3.reshape(shape)


# -----------------------------------------------------------------------------
# Pure-JAX reference (validation)
# -----------------------------------------------------------------------------
def _reference(x, gamma, beta, *, per_channel=True, eps=1e-5):
    shape = x.shape
    if per_channel:
        x3 = x.reshape(shape[0], -1, shape[-1])
    else:
        x3 = x.reshape((-1,) + shape[-2:])
    x3 = x3.astype(jnp.float32)
    mean = jnp.mean(x3, axis=(0, 2), keepdims=True)
    var = jnp.mean(jnp.square(x3 - mean), axis=(0, 2), keepdims=True)  # biased
    xhat = (x3 - mean) / jnp.sqrt(var + eps)
    out = xhat * gamma.reshape(1, -1, 1) + beta.reshape(1, -1, 1)
    return out.reshape(shape)


if __name__ == "__main__":
    key = jax.random.PRNGKey(0)
    kx, kg, kb = jax.random.split(key, 3)

    # (batch, channels, bands, time) as in the module docstring.
    B, C, F, T = 2, 4, 16, 16
    num_features = C * F                                        # per_channel=True

    x = jax.random.normal(kx, (B, C, F, T), dtype=jnp.float32)
    gamma = 1.0 + 0.1 * jax.random.normal(kg, (num_features,), dtype=jnp.float32)
    beta = 0.1 * jax.random.normal(kb, (num_features,), dtype=jnp.float32)

    ref = _reference(x, gamma, beta, per_channel=True)

    # Default dispatch (fused fast path at this size).
    out = jax.block_until_ready(temporal_batch_norm(x, gamma, beta))
    assert out.shape == (B, C, F, T)
    assert jnp.allclose(out, ref, atol=1e-5, rtol=1e-5), "fused path mismatch"

    # Also exercise the tiled two-pass path (with T zero-padding) for coverage.
    out_t = jax.block_until_ready(
        temporal_batch_norm(x, gamma, beta, force_path="tiled"))
    assert jnp.allclose(out_t, ref, atol=1e-5, rtol=1e-5), "tiled path mismatch"

    print("KERNEL_OK")
</pallas_src>

<mosaic_0001>
module attributes {stable_mosaic.version = 11 : i64} {
  func.func @_bn_fused_kernel(%arg0: memref<2x64x16xf32, #tpu.memory_space<vmem>>, %arg1: memref<64x1xf32, #tpu.memory_space<vmem>>, %arg2: memref<64x1xf32, #tpu.memory_space<vmem>>, %arg3: memref<2x64x16xf32, #tpu.memory_space<vmem>>) attributes {dimension_semantics = [], scalar_prefetch = 0 : i64, scratch_operands = 0 : i64, tpu.core_type = #tpu.core_type<tc>} {
    %c0 = arith.constant 0 : index
    %c0_0 = arith.constant 0 : index
    %c0_1 = arith.constant 0 : index
    %0 = vector.load %arg0[%c0, %c0_0, %c0_1] : memref<2x64x16xf32, #tpu.memory_space<vmem>>, vector<2x64x16xf32>
    %cst = arith.constant dense<0.000000e+00> : vector<2x64xf32>
    %1 = vector.multi_reduction <add>, %0, %cst [2] : vector<2x64x16xf32> to vector<2x64xf32>
    %2 = vector.shape_cast %1 : vector<2x64xf32> to vector<2x64x1xf32>
    %cst_2 = arith.constant dense<0.000000e+00> : vector<64x1xf32>
    %3 = vector.multi_reduction <add>, %2, %cst_2 [0] : vector<2x64x1xf32> to vector<64x1xf32>
    %4 = arith.mulf %0, %0 : vector<2x64x16xf32>
    %cst_3 = arith.constant dense<0.000000e+00> : vector<2x64xf32>
    %5 = vector.multi_reduction <add>, %4, %cst_3 [2] : vector<2x64x16xf32> to vector<2x64xf32>
    %6 = vector.shape_cast %5 : vector<2x64xf32> to vector<2x64x1xf32>
    %cst_4 = arith.constant dense<0.000000e+00> : vector<64x1xf32>
    %7 = vector.multi_reduction <add>, %6, %cst_4 [0] : vector<2x64x1xf32> to vector<64x1xf32>
    %cst_5 = arith.constant 3.125000e-02 : f32
    %8 = vector.broadcast %cst_5 : f32 to vector<64x1xf32>
    %9 = arith.mulf %3, %8 : vector<64x1xf32>
    %cst_6 = arith.constant 3.125000e-02 : f32
    %10 = vector.broadcast %cst_6 : f32 to vector<64x1xf32>
    %11 = arith.mulf %7, %10 : vector<64x1xf32>
    %12 = arith.mulf %9, %9 : vector<64x1xf32>
    %13 = arith.subf %11, %12 : vector<64x1xf32>
    %cst_7 = arith.constant 0.000000e+00 : f32
    %14 = vector.broadcast %cst_7 : f32 to vector<64x1xf32>
    %15 = arith.maximumf %13, %14 : vector<64x1xf32>
    %cst_8 = arith.constant 9.99999974E-6 : f32
    %16 = vector.broadcast %cst_8 : f32 to vector<64x1xf32>
    %17 = arith.addf %15, %16 : vector<64x1xf32>
    %18 = math.rsqrt %17 : vector<64x1xf32>
    %c0_9 = arith.constant 0 : index
    %c0_10 = arith.constant 0 : index
    %19 = vector.load %arg1[%c0_9, %c0_10] : memref<64x1xf32, #tpu.memory_space<vmem>>, vector<64x1xf32>
    %20 = arith.mulf %19, %18 : vector<64x1xf32>
    %c0_11 = arith.constant 0 : index
    %c0_12 = arith.constant 0 : index
    %21 = vector.load %arg2[%c0_11, %c0_12] : memref<64x1xf32, #tpu.memory_space<vmem>>, vector<64x1xf32>
    %22 = arith.mulf %9, %20 : vector<64x1xf32>
    %23 = arith.subf %21, %22 : vector<64x1xf32>
    %24 = vector.shape_cast %20 : vector<64x1xf32> to vector<1x64x1xf32>
    %25 = vector.broadcast %24 : vector<1x64x1xf32> to vector<2x64x16xf32>
    %26 = arith.mulf %0, %25 : vector<2x64x16xf32>
    %27 = vector.shape_cast %23 : vector<64x1xf32> to vector<1x64x1xf32>
    %28 = vector.broadcast %27 : vector<1x64x1xf32> to vector<2x64x16xf32>
    %29 = arith.addf %26, %28 : vector<2x64x16xf32>
    %c0_13 = arith.constant 0 : index
    %c0_14 = arith.constant 0 : index
    %c0_15 = arith.constant 0 : index
    %30 = vector.load %arg3[%c0_13, %c0_14, %c0_15] : memref<2x64x16xf32, #tpu.memory_space<vmem>>, vector<2x64x16xf32>
    tpu.vector_store %arg3[%c0_13, %c0_14, %c0_15], %29 {strides = array<i32>} : memref<2x64x16xf32, #tpu.memory_space<vmem>>, vector<2x64x16xf32>,
    return
  }
}

</mosaic_0001>

<llo_original>
// kernel: tpu_custom_call.1
$region0: #{tpu_custom_call.1}
  #allocation0 [shape = 'u32[]', space=smem, size = 0x4, offset = 0x4, fixed_abs, tag = 'smem constant byte address 0x4 - core index']
  #allocation1 [shape = 'u32[144,128]{1,0:T(1,128)}', space=vmem, size = 0x12000, scoped, tag = 'internal scratch']
  %s0 = inlined_call_operand.vmem [shape: f32[2,64,16], index: 0, kind: input, shape index: {}]
  %s1 = inlined_call_operand.vmem [shape: f32[64,1], index: 1, kind: input, shape index: {}]
  %s2 = inlined_call_operand.vmem [shape: f32[64,1], index: 2, kind: input, shape index: {}]
  %s3 = inlined_call_operand.vmem [shape: f32[2,64,16], index: 3, kind: output, shape index: {}]
  %s4 = sld [smem:[#allocation0]]
  $region22: #{tpu_custom_call.1} parent=0
    _
  %s6 = ssub.s32 1, %s4
  %s7 = scalar_select 0, %s6, %s4
  // Predicated region
  $region2: #{tpu_custom_call.1} parent=0 // pred_check
    _
  $region3: #{tpu_custom_call.1} parent=0 // pred_check_branch
    %9 = sbr.rel (0) target = $region5
  $region4: #{tpu_custom_call.1} parent=0 // pred_region
    _
  $region5: #{tpu_custom_call.1} parent=0 // pred_fallthru
    _
  // Predicated region
  $region6: #{tpu_custom_call.1} parent=0 // pred_check
    _
  $region7: #{tpu_custom_call.1} parent=0 // pred_check_branch
    %11 = sbr.rel (0) target = $region9
  $region8: #{tpu_custom_call.1} parent=0 // pred_region
    _
  $region9: #{tpu_custom_call.1} parent=0 // pred_fallthru
    _
  // Predicated region
  $region10: #{tpu_custom_call.1} parent=0 // pred_check
    _
  $region11: #{tpu_custom_call.1} parent=0 // pred_check_branch
    %13 = sbr.rel (0) target = $region13
  $region12: #{tpu_custom_call.1} parent=0 // pred_region
    _
  $region13: #{tpu_custom_call.1} parent=0 // pred_fallthru
    _
  %v14 = vld [vmem:[%s0] sm:$0xff]
  %v15 = vld [vmem:[%s0 + $0x8] sm:$0xff]
  %v16 = vld [vmem:[%s0 + $0x10] sm:$0xff]
  %v17 = vld [vmem:[%s0 + $0x18] sm:$0xff]
  %v18 = vld [vmem:[%s0 + $0x20] sm:$0xff]
  %v19 = vld [vmem:[%s0 + $0x28] sm:$0xff]
  %v20 = vld [vmem:[%s0 + $0x30] sm:$0xff]
  %v21 = vld [vmem:[%s0 + $0x38] sm:$0xff]
  %v22 = vld [vmem:[%s0 + $0x40] sm:$0xff]
  %v23 = vld [vmem:[%s0 + $0x48] sm:$0xff]
  %v24 = vld [vmem:[%s0 + $0x50] sm:$0xff]
  %v25 = vld [vmem:[%s0 + $0x58] sm:$0xff]
  %v26 = vld [vmem:[%s0 + $0x60] sm:$0xff]
  %v27 = vld [vmem:[%s0 + $0x68] sm:$0xff]
  %v28 = vld [vmem:[%s0 + $0x70] sm:$0xff]
  %v29 = vld [vmem:[%s0 + $0x78] sm:$0xff]
  %vm30 = vcmask 130048
  %v31 = vsel %vm30, %v14, 0.0
  %32 = vadd.xlane.f32.xlu0 %v31
  %v33 = vpop.xlane.xlu0 %32
  %v34 = vsel %vm30, %v15, 0.0
  %35 = vadd.xlane.f32.xlu0 %v34
  %v36 = vpop.xlane.xlu0 %35
  %v37 = vsel %vm30, %v16, 0.0
  %38 = vadd.xlane.f32.xlu0 %v37
  %v39 = vpop.xlane.xlu0 %38
  %v40 = vsel %vm30, %v17, 0.0
  %41 = vadd.xlane.f32.xlu0 %v40
  %v42 = vpop.xlane.xlu0 %41
  %v43 = vsel %vm30, %v18, 0.0
  %44 = vadd.xlane.f32.xlu0 %v43
  %v45 = vpop.xlane.xlu0 %44
  %v46 = vsel %vm30, %v19, 0.0
  %47 = vadd.xlane.f32.xlu0 %v46
  %v48 = vpop.xlane.xlu0 %47
  %v49 = vsel %vm30, %v20, 0.0
  %50 = vadd.xlane.f32.xlu0 %v49
  %v51 = vpop.xlane.xlu0 %50
  %v52 = vsel %vm30, %v21, 0.0
  %53 = vadd.xlane.f32.xlu0 %v52
  %v54 = vpop.xlane.xlu0 %53
  %v55 = vsel %vm30, %v22, 0.0
  %56 = vadd.xlane.f32.xlu0 %v55
  %v57 = vpop.xlane.xlu0 %56
  %v58 = vsel %vm30, %v23, 0.0
  %59 = vadd.xlane.f32.xlu0 %v58
  %v60 = vpop.xlane.xlu0 %59
  %v61 = vsel %vm30, %v24, 0.0
  %62 = vadd.xlane.f32.xlu0 %v61
  %v63 = vpop.xlane.xlu0 %62
  %v64 = vsel %vm30, %v25, 0.0
  %65 = vadd.xlane.f32.xlu0 %v64
  %v66 = vpop.xlane.xlu0 %65
  %v67 = vsel %vm30, %v26, 0.0
  %68 = vadd.xlane.f32.xlu0 %v67
  %v69 = vpop.xlane.xlu0 %68
  %v70 = vsel %vm30, %v27, 0.0
  %71 = vadd.xlane.f32.xlu0 %v70
  %v72 = vpop.xlane.xlu0 %71
  %v73 = vsel %vm30, %v28, 0.0
  %74 = vadd.xlane.f32.xlu0 %v73
  %v75 = vpop.xlane.xlu0 %74
  %v76 = vsel %vm30, %v29, 0.0
  %77 = vadd.xlane.f32.xlu0 %v76
  %v78 = vpop.xlane.xlu0 %77
  %v79 = vadd.f32 %v33, %v57
  %v80 = vadd.f32 %v36, %v60
  %v81 = vadd.f32 %v39, %v63
  %v82 = vadd.f32 %v42, %v66
  %v83 = vadd.f32 %v45, %v69
  %v84 = vadd.f32 %v48, %v72
  %v85 = vadd.f32 %v51, %v75
  %v86 = vadd.f32 %v54, %v78
  %v87 = vmul.f32 %v14, %v14
  %v88 = vmul.f32 %v15, %v15
  %v89 = vmul.f32 %v16, %v16
  %v90 = vmul.f32 %v17, %v17
  %v91 = vmul.f32 %v18, %v18
  %v92 = vmul.f32 %v19, %v19
  %v93 = vmul.f32 %v20, %v20
  %v94 = vmul.f32 %v21, %v21
  %v95 = vmul.f32 %v22, %v22
  %v96 = vmul.f32 %v23, %v23
  %v97 = vmul.f32 %v24, %v24
  %v98 = vmul.f32 %v25, %v25
  %v99 = vmul.f32 %v26, %v26
  %v100 = vmul.f32 %v27, %v27
  %v101 = vmul.f32 %v28, %v28
  %v102 = vmul.f32 %v29, %v29
  %v103 = vsel %vm30, %v87, 0.0
  %104 = vadd.xlane.f32.xlu0 %v103
  %v105 = vpop.xlane.xlu0 %104
  %v106 = vsel %vm30, %v88, 0.0
  %107 = vadd.xlane.f32.xlu0 %v106
  %v108 = vpop.xlane.xlu0 %107
  %v109 = vsel %vm30, %v89, 0.0
  %110 = vadd.xlane.f32.xlu0 %v109
  %v111 = vpop.xlane.xlu0 %110
  %v112 = vsel %vm30, %v90, 0.0
  %113 = vadd.xlane.f32.xlu0 %v112
  %v114 = vpop.xlane.xlu0 %113
  %v115 = vsel %vm30, %v91, 0.0
  %116 = vadd.xlane.f32.xlu0 %v115
  %v117 = vpop.xlane.xlu0 %116
  %v118 = vsel %vm30, %v92, 0.0
  %119 = vadd.xlane.f32.xlu0 %v118
  %v120 = vpop.xlane.xlu0 %119
  %v121 = vsel %vm30, %v93, 0.0
  %122 = vadd.xlane.f32.xlu0 %v121
  %v123 = vpop.xlane.xlu0 %122
  %v124 = vsel %vm30, %v94, 0.0
  %125 = vadd.xlane.f32.xlu0 %v124
  %v126 = vpop.xlane.xlu0 %125
  %v127 = vsel %vm30, %v95, 0.0
  %128 = vadd.xlane.f32.xlu0 %v127
  %v129 = vpop.xlane.xlu0 %128
  %v130 = vsel %vm30, %v96, 0.0
  %131 = vadd.xlane.f32.xlu0 %v130
  %v132 = vpop.xlane.xlu0 %131
  %v133 = vsel %vm30, %v97, 0.0
  %134 = vadd.xlane.f32.xlu0 %v133
  %v135 = vpop.xlane.xlu0 %134
  %v136 = vsel %vm30, %v98, 0.0
  %137 = vadd.xlane.f32.xlu0 %v136
  %v138 = vpop.xlane.xlu0 %137
  %v139 = vsel %vm30, %v99, 0.0
  %140 = vadd.xlane.f32.xlu0 %v139
  %v141 = vpop.xlane.xlu0 %140
  %v142 = vsel %vm30, %v100, 0.0
  %143 = vadd.xlane.f32.xlu0 %v142
  %v144 = vpop.xlane.xlu0 %143
  %v145 = vsel %vm30, %v101, 0.0
  %146 = vadd.xlane.f32.xlu0 %v145
  %v147 = vpop.xlane.xlu0 %146
  %v148 = vsel %vm30, %v102, 0.0
  %149 = vadd.xlane.f32.xlu0 %v148
  %v150 = vpop.xlane.xlu0 %149
  %v151 = vadd.f32 %v105, %v129
  %v152 = vadd.f32 %v108, %v132
  %v153 = vadd.f32 %v111, %v135
  %v154 = vadd.f32 %v114, %v138
  %v155 = vadd.f32 %v117, %v141
  %v156 = vadd.f32 %v120, %v144
  %v157 = vadd.f32 %v123, %v147
  %v158 = vadd.f32 %v126, %v150
  %v159 = vmul.f32 %v79, 0.03125
  %v160 = vmul.f32 %v80, 0.03125
  %v161 = vmul.f32 %v81, 0.03125
  %v162 = vmul.f32 %v82, 0.03125
  %v163 = vmul.f32 %v83, 0.03125
  %v164 = vmul.f32 %v84, 0.03125
  %v165 = vmul.f32 %v85, 0.03125
  %v166 = vmul.f32 %v86, 0.03125
  %v167 = vmul.f32 %v151, 0.03125
  %v168 = vmul.f32 %v152, 0.03125
  %v169 = vmul.f32 %v153, 0.03125
  %v170 = vmul.f32 %v154, 0.03125
  %v171 = vmul.f32 %v155, 0.03125
  %v172 = vmul.f32 %v156, 0.03125
  %v173 = vmul.f32 %v157, 0.03125
  %v174 = vmul.f32 %v158, 0.03125
  %v175 = vmul.f32 %v159, %v159
  %v176 = vmul.f32 %v160, %v160
  %v177 = vmul.f32 %v161, %v161
  %v178 = vmul.f32 %v162, %v162
  %v179 = vmul.f32 %v163, %v163
  %v180 = vmul.f32 %v164, %v164
  %v181 = vmul.f32 %v165, %v165
  %v182 = vmul.f32 %v166, %v166
  %v183 = vsub.f32 %v167, %v175
  %v184 = vsub.f32 %v168, %v176
  %v185 = vsub.f32 %v169, %v177
  %v186 = vsub.f32 %v170, %v178
  %v187 = vsub.f32 %v171, %v179
  %v188 = vsub.f32 %v172, %v180
  %v189 = vsub.f32 %v173, %v181
  %v190 = vsub.f32 %v174, %v182
  %v191 = vmax.f32 %v183, 0.0
  %v192 = vmax.f32 %v184, 0.0
  %v193 = vmax.f32 %v185, 0.0
  %v194 = vmax.f32 %v186, 0.0
  %v195 = vmax.f32 %v187, 0.0
  %v196 = vmax.f32 %v188, 0.0
  %v197 = vmax.f32 %v189, 0.0
  %v198 = vmax.f32 %v190, 0.0
  %v199 = vadd.f32 %v191, 1e-05
  %v200 = vadd.f32 %v192, 1e-05
  %v201 = vadd.f32 %v193, 1e-05
  %v202 = vadd.f32 %v194, 1e-05
  %v203 = vadd.f32 %v195, 1e-05
  %v204 = vadd.f32 %v196, 1e-05
  %v205 = vadd.f32 %v197, 1e-05
  %v206 = vadd.f32 %v198, 1e-05
  %v207 = vrsqrt.pop %v199
  %v208 = vrsqrt.pop %v200
  %v209 = vrsqrt.pop %v201
  %v210 = vrsqrt.pop %v202
  %v211 = vrsqrt.pop %v203
  %v212 = vrsqrt.pop %v204
  %v213 = vrsqrt.pop %v205
  %v214 = vrsqrt.pop %v206
  %v215 = vld [vmem:[%s1] sm:$0xff]
  %v216 = vld [vmem:[%s1 + $0x8] sm:$0xff]
  %v217 = vld [vmem:[%s1 + $0x10] sm:$0xff]
  %v218 = vld [vmem:[%s1 + $0x18] sm:$0xff]
  %v219 = vld [vmem:[%s1 + $0x20] sm:$0xff]
  %v220 = vld [vmem:[%s1 + $0x28] sm:$0xff]
  %v221 = vld [vmem:[%s1 + $0x30] sm:$0xff]
  %v222 = vld [vmem:[%s1 + $0x38] sm:$0xff]
  %v223 = vmul.f32 %v215, %v207
  %v224 = vmul.f32 %v216, %v208
  %v225 = vmul.f32 %v217, %v209
  %v226 = vmul.f32 %v218, %v210
  %v227 = vmul.f32 %v219, %v211
  %v228 = vmul.f32 %v220, %v212
  %v229 = vmul.f32 %v221, %v213
  %v230 = vmul.f32 %v222, %v214
  %v231 = vld [vmem:[%s2] sm:$0xff]
  %v232 = vld [vmem:[%s2 + $0x8] sm:$0xff]
  %v233 = vld [vmem:[%s2 + $0x10] sm:$0xff]
  %v234 = vld [vmem:[%s2 + $0x18] sm:$0xff]
  %v235 = vld [vmem:[%s2 + $0x20] sm:$0xff]
  %v236 = vld [vmem:[%s2 + $0x28] sm:$0xff]
  %v237 = vld [vmem:[%s2 + $0x30] sm:$0xff]
  %v238 = vld [vmem:[%s2 + $0x38] sm:$0xff]
  %v239 = vmul.f32 %v159, %v223
  %v240 = vmul.f32 %v160, %v224
  %v241 = vmul.f32 %v161, %v225
  %v242 = vmul.f32 %v162, %v226
  %v243 = vmul.f32 %v163, %v227
  %v244 = vmul.f32 %v164, %v228
  %v245 = vmul.f32 %v165, %v229
  %v246 = vmul.f32 %v166, %v230
  %v247 = vsub.f32 %v231, %v239
  %v248 = vsub.f32 %v232, %v240
  %v249 = vsub.f32 %v233, %v241
  %v250 = vsub.f32 %v234, %v242
  %v251 = vsub.f32 %v235, %v243
  %v252 = vsub.f32 %v236, %v244
  %v253 = vsub.f32 %v237, %v245
  %v254 = vsub.f32 %v238, %v246
  %256 = vset.pattern.permute.xlu0 0
  %257 = vperm.xlu0 %256, %v223
  %v258 = vpop.permute.xlu0 %257
  %261 = vset.pattern.permute.xlu0 0
  %262 = vperm.xlu0 %261, %v224
  %v263 = vpop.permute.xlu0 %262
  %266 = vset.pattern.permute.xlu0 0
  %267 = vperm.xlu0 %266, %v225
  %v268 = vpop.permute.xlu0 %267
  %271 = vset.pattern.permute.xlu0 0
  %272 = vperm.xlu0 %271, %v226
  %v273 = vpop.permute.xlu0 %272
  %276 = vset.pattern.permute.xlu0 0
  %277 = vperm.xlu0 %276, %v227
  %v278 = vpop.permute.xlu0 %277
  %281 = vset.pattern.permute.xlu0 0
  %282 = vperm.xlu0 %281, %v228
  %v283 = vpop.permute.xlu0 %282
  %286 = vset.pattern.permute.xlu0 0
  %287 = vperm.xlu0 %286, %v229
  %v288 = vpop.permute.xlu0 %287
  %291 = vset.pattern.permute.xlu0 0
  %292 = vperm.xlu0 %291, %v230
  %v293 = vpop.permute.xlu0 %292
  %v295 = vmul.f32 %v14, %v258
  %v296 = vmul.f32 %v15, %v263
  %v297 = vmul.f32 %v16, %v268
  %v298 = vmul.f32 %v17, %v273
  %v299 = vmul.f32 %v18, %v278
  %v300 = vmul.f32 %v19, %v283
  %v301 = vmul.f32 %v20, %v288
  %v302 = vmul.f32 %v21, %v293
  %v303 = vmul.f32 %v22, %v258
  %v304 = vmul.f32 %v23, %v263
  %v305 = vmul.f32 %v24, %v268
  %v306 = vmul.f32 %v25, %v273
  %v307 = vmul.f32 %v26, %v278
  %v308 = vmul.f32 %v27, %v283
  %v309 = vmul.f32 %v28, %v288
  %v310 = vmul.f32 %v29, %v293
  %312 = vset.pattern.permute.xlu0 0
  %313 = vperm.xlu0 %312, %v247
  %v314 = vpop.permute.xlu0 %313
  %317 = vset.pattern.permute.xlu0 0
  %318 = vperm.xlu0 %317, %v248
  %v319 = vpop.permute.xlu0 %318
  %322 = vset.pattern.permute.xlu0 0
  %323 = vperm.xlu0 %322, %v249
  %v324 = vpop.permute.xlu0 %323
  %327 = vset.pattern.permute.xlu0 0
  %328 = vperm.xlu0 %327, %v250
  %v329 = vpop.permute.xlu0 %328
  %332 = vset.pattern.permute.xlu0 0
  %333 = vperm.xlu0 %332, %v251
  %v334 = vpop.permute.xlu0 %333
  %337 = vset.pattern.permute.xlu0 0
  %338 = vperm.xlu0 %337, %v252
  %v339 = vpop.permute.xlu0 %338
  %342 = vset.pattern.permute.xlu0 0
  %343 = vperm.xlu0 %342, %v253
  %v344 = vpop.permute.xlu0 %343
  %347 = vset.pattern.permute.xlu0 0
  %348 = vperm.xlu0 %347, %v254
  %v349 = vpop.permute.xlu0 %348
  %v351 = vadd.f32 %v295, %v314
  %v352 = vadd.f32 %v296, %v319
  %v353 = vadd.f32 %v297, %v324
  %v354 = vadd.f32 %v298, %v329
  %v355 = vadd.f32 %v299, %v334
  %v356 = vadd.f32 %v300, %v339
  %v357 = vadd.f32 %v301, %v344
  %v358 = vadd.f32 %v302, %v349
  %v359 = vadd.f32 %v303, %v314
  %v360 = vadd.f32 %v304, %v319
  %v361 = vadd.f32 %v305, %v324
  %v362 = vadd.f32 %v306, %v329
  %v363 = vadd.f32 %v307, %v334
  %v364 = vadd.f32 %v308, %v339
  %v365 = vadd.f32 %v309, %v344
  %v366 = vadd.f32 %v310, %v349
  %367 = vst.msk [vmem:[%s3] sm:$0xff] %vm30, %v351
  %368 = vst.msk [vmem:[%s3 + $0x8] sm:$0xff] %vm30, %v352
  %369 = vst.msk [vmem:[%s3 + $0x10] sm:$0xff] %vm30, %v353
  %370 = vst.msk [vmem:[%s3 + $0x18] sm:$0xff] %vm30, %v354
  %371 = vst.msk [vmem:[%s3 + $0x20] sm:$0xff] %vm30, %v355
  %372 = vst.msk [vmem:[%s3 + $0x28] sm:$0xff] %vm30, %v356
  %373 = vst.msk [vmem:[%s3 + $0x30] sm:$0xff] %vm30, %v357
  %374 = vst.msk [vmem:[%s3 + $0x38] sm:$0xff] %vm30, %v358
  %375 = vst.msk [vmem:[%s3 + $0x40] sm:$0xff] %vm30, %v359
  %376 = vst.msk [vmem:[%s3 + $0x48] sm:$0xff] %vm30, %v360
  %377 = vst.msk [vmem:[%s3 + $0x50] sm:$0xff] %vm30, %v361
  %378 = vst.msk [vmem:[%s3 + $0x58] sm:$0xff] %vm30, %v362
  %379 = vst.msk [vmem:[%s3 + $0x60] sm:$0xff] %vm30, %v363
  %380 = vst.msk [vmem:[%s3 + $0x68] sm:$0xff] %vm30, %v364
  %381 = vst.msk [vmem:[%s3 + $0x70] sm:$0xff] %vm30, %v365
  %382 = vst.msk [vmem:[%s3 + $0x78] sm:$0xff] %vm30, %v366
  // Predicated region
  $region14: #{tpu_custom_call.1} parent=0 // pred_check
    _
  $region15: #{tpu_custom_call.1} parent=0 // pred_check_branch
    %384 = sbr.rel (0) target = $region17
  $region16: #{tpu_custom_call.1} parent=0 // pred_region
    _
  $region17: #{tpu_custom_call.1} parent=0 // pred_fallthru
    _
  // Predicated region
  $region18: #{tpu_custom_call.1} parent=0 // pred_check
    _
  $region19: #{tpu_custom_call.1} parent=0 // pred_check_branch
    %386 = sbr.rel (0) target = $region21
  $region20: #{tpu_custom_call.1} parent=0 // pred_region
    _
  $region21: #{tpu_custom_call.1} parent=0 // pred_fallthru
    _

</llo_original>
